<compile_context>
chip_gen: v7x
topology: tpu7x:2x2x1
jax: 0.10.0
libtpu: 0.0.40
codegen_flags: <defaults>
</compile_context>

<pallas_src>
import numpy as np
import jax
import jax.numpy as jnp
from jax import lax
from jax.experimental import pallas as pl
from jax.experimental.pallas import tpu as pltpu


def _round_up(x, m):
    return ((x + m - 1) // m) * m


def _pair_mlp_kernel(idx_ref, atom_t_ref, w1t_ref, b1_ref, w2_ref, b2_ref, o_ref):
    """Process TP pairs per grid step, all in transposed (feature-major) layout.

    idx_ref:    (2, TP)     int32  global atom indices of each pair's two atoms
    atom_t_ref: (F, N_pad)  f32    transposed atom features (constant across the grid)
    w1t_ref:    (H, F)      f32    0.5 * W_p_h^T  (pair-mean scale folded in)
    b1_ref:     (H, 1)      f32
    w2_ref:     (H, C)      f32
    b2_ref:     (1, C)      f32    in SMEM (read as scalars)
    o_ref:      (C, TP)     f32    lane-dense output tile
    """
    n_pad = atom_t_ref.shape[1]
    tp = idx_ref.shape[1]
    n_classes = o_ref.shape[0]

    idx = idx_ref[...]                      # (2, TP) int32
    idx0 = idx[0:1, :]                      # (1, TP)
    idx1 = idx[1:2, :]                      # (1, TP)

    # Fused gather + pair-sum: one-hot selection matrix run through the MXU.
    # sel[n, p] = (idx0[p] == n) + (idx1[p] == n)   (2 when a pair repeats an atom,
    # which reproduces torch.mean over a duplicated row exactly once 0.5 is folded in).
    atom_ids = lax.broadcasted_iota(jnp.int32, (n_pad, tp), 0)           # (N_pad, TP)
    sel = (atom_ids == idx0).astype(jnp.float32) + (atom_ids == idx1).astype(jnp.float32)

    # pair_sum^T = atom_h^T @ sel ; the 0.5 mean factor lives in w1t already.
    pair_sum_t = jnp.dot(atom_t_ref[...], sel,
                         preferred_element_type=jnp.float32)             # (F, TP)

    # Hidden layer (transposed): h^T = relu(0.5*W1^T @ pair_sum^T + b1)
    h_t = jnp.dot(w1t_ref[...], pair_sum_t,
                  preferred_element_type=jnp.float32)                    # (H, TP)
    h_t = jnp.maximum(h_t + b1_ref[...], 0.0)

    # Output layer: per-class VPU multiply + sublane (XLU) reduction, assembled into
    # one lane-dense (C, TP) block and written with a single unmasked store.
    w2 = w2_ref[...]                                                     # (H, C)
    cols = []
    for c in range(n_classes):                                           # static, unrolled
        col = jnp.sum(h_t * w2[:, c:c + 1], axis=0, keepdims=True)       # (1, TP)
        cols.append(col + b2_ref[0, c])
    o_t = cols[0] if n_classes == 1 else jnp.concatenate(cols, axis=0)   # (C, TP)
    o_ref[...] = o_t


def atom_predictor_forward(atom_h, scope, pair_idx_list, params, *, tile_p=256):
    """Reproduces AtomPredictor.forward given precomputed backbone output atom_h.

    atom_h:        (N_atoms, F) float32 backbone atom representations
    scope:         list of (start, length) per molecule (python ints)
    pair_idx_list: list of (n_pairs_i, 2) int arrays of per-molecule atom indices
    params:        dict with w1 (F,H), b1 (H,), w2 (H,C), b2 (C,)
    returns:       (total_pairs, C) float32
    """
    # ---- host-side glue: local -> global pair indices ----
    global_idx = []
    for (st, le), p in zip(scope, pair_idx_list):
        p = np.asarray(p, dtype=np.int32)
        assert p.ndim == 2 and p.shape[1] == 2
        assert (p >= 0).all() and (p < le).all()
        global_idx.append(p + st)
    global_idx = np.concatenate(global_idx, axis=0)                      # (P, 2)

    n_atoms, f = atom_h.shape
    h = params["w1"].shape[1]
    c = params["w2"].shape[1]
    p_total = global_idx.shape[0]

    # Pad P to a multiple of the tile (padded pairs point at atom 0; sliced off below).
    p_pad = max(tile_p, _round_up(p_total, tile_p))
    idx_pad = np.zeros((p_pad, 2), dtype=np.int32)
    idx_pad[:p_total] = global_idx
    idx_t = jnp.asarray(idx_pad.T)                                       # (2, P_pad)

    # Transposed, zero-padded atom features -- stays VMEM-resident across the grid.
    n_pad = _round_up(max(n_atoms, 8), 8)
    atom_t = jnp.zeros((f, n_pad), dtype=jnp.float32)
    atom_t = atom_t.at[:, :n_atoms].set(jnp.asarray(atom_h, dtype=jnp.float32).T)

    # One-time weight transforms (fold the pair-mean 0.5 into W_p_h).
    w1t = (0.5 * jnp.asarray(params["w1"], jnp.float32)).T               # (H, F)
    b1 = jnp.asarray(params["b1"], jnp.float32).reshape(h, 1)            # (H, 1)
    w2 = jnp.asarray(params["w2"], jnp.float32)                          # (H, C)
    b2 = jnp.asarray(params["b2"], jnp.float32).reshape(1, c)            # (1, C) -> SMEM

    grid = (p_pad // tile_p,)
    out_t = pl.pallas_call(
        _pair_mlp_kernel,
        out_shape=jax.ShapeDtypeStruct((c, p_pad), jnp.float32),
        grid=grid,
        in_specs=[
            pl.BlockSpec((2, tile_p), lambda i: (0, i)),        # pair indices (tiled)
            pl.BlockSpec((f, n_pad), lambda i: (0, 0)),         # atom_h^T (resident)
            pl.BlockSpec((h, f), lambda i: (0, 0)),             # 0.5*W1^T (resident)
            pl.BlockSpec((h, 1), lambda i: (0, 0)),             # b1      (resident)
            pl.BlockSpec((h, c), lambda i: (0, 0)),             # W2      (resident)
            pl.BlockSpec(memory_space=pltpu.MemorySpace.SMEM),  # b2 scalar(s) in SMEM
        ],
        out_specs=pl.BlockSpec((c, tile_p), lambda i: (0, i)),  # lane-dense (C, TP)
        compiler_params=pltpu.CompilerParams(
            dimension_semantics=("parallel",),      # shard pair tiles across TCs (v7x)
            vmem_limit_bytes=32 * 1024 * 1024,      # per-step footprint is ~100s of KB
        ),
    )(idx_t, atom_t, w1t, b1, w2, b2)

    # (C, P_pad) lane-dense result -> module layout (P, C).
    return out_t[:, :p_total].T


def _reference_forward(atom_h, scope, pair_idx_list, params):
    """Exact float64 numpy reference matching the PyTorch forward."""
    atom_np = np.asarray(atom_h, dtype=np.float64)
    w1 = np.asarray(params["w1"], dtype=np.float64)
    b1 = np.asarray(params["b1"], dtype=np.float64)
    w2 = np.asarray(params["w2"], dtype=np.float64)
    b2 = np.asarray(params["b2"], dtype=np.float64)
    rows = []
    for (st, le), p in zip(scope, pair_idx_list):
        cur = atom_np[st:st + le]
        p = np.asarray(p, dtype=np.int64).reshape(-1)
        sel = cur[p].reshape(-1, 2, atom_np.shape[1])
        rows.append(sel.mean(axis=1))
    x = np.concatenate(rows, axis=0)
    hid = np.maximum(x @ w1 + b1, 0.0)
    return hid @ w2 + b2


if __name__ == "__main__":
    # small, deterministic example shapes
    F = 32            # backbone output size (model.output_size)
    H = 32            # args.hidden_size
    C = 1             # n_classes
    scope = [(0, 5), (5, 7)]          # two molecules: 5 atoms, 7 atoms
    N_atoms = 12

    pair_idx_list = [
        np.array([[0, 1], [1, 4], [2, 3]], dtype=np.int32),          # mol 0: 3 pairs
        np.array([[0, 2], [1, 6], [3, 5], [4, 4]], dtype=np.int32),  # mol 1: 4 pairs
    ]

    key = jax.random.PRNGKey(0)
    k_atom, k_w1, k_b1, k_w2, k_b2 = jax.random.split(key, 5)
    atom_h = jax.random.normal(k_atom, (N_atoms, F), dtype=jnp.float32)
    params = {
        "w1": jax.random.normal(k_w1, (F, H), dtype=jnp.float32) * 0.1,
        "b1": jax.random.normal(k_b1, (H,), dtype=jnp.float32) * 0.1,
        "w2": jax.random.normal(k_w2, (H, C), dtype=jnp.float32) * 0.1,
        "b2": jax.random.normal(k_b2, (C,), dtype=jnp.float32) * 0.1,
    }

    out = atom_predictor_forward(atom_h, scope, pair_idx_list, params)
    out = jax.block_until_ready(out)

    ref = _reference_forward(np.asarray(atom_h), scope, pair_idx_list,
                             {k: np.asarray(v) for k, v in params.items()})
    # tolerance leaves headroom for TPU MXU default f32 matmul precision
    np.testing.assert_allclose(np.asarray(out), ref, rtol=5e-3, atol=5e-3)

    print("KERNEL_OK")
</pallas_src>

<mosaic_0001>
module attributes {stable_mosaic.version = 11 : i64} {
  func.func @_pair_mlp_kernel(%arg0: i32, %arg1: memref<2x256xi32, #tpu.memory_space<vmem>>, %arg2: memref<32x16xf32, #tpu.memory_space<vmem>>, %arg3: memref<32x32xf32, #tpu.memory_space<vmem>>, %arg4: memref<32x1xf32, #tpu.memory_space<vmem>>, %arg5: memref<32x1xf32, #tpu.memory_space<vmem>>, %arg6: memref<1x1xf32, #tpu.memory_space<smem>>, %arg7: memref<1x256xf32, #tpu.memory_space<vmem>>) attributes {dimension_semantics = [#tpu.dimension_semantics<parallel>], iteration_bounds = array<i64: 1>, scalar_prefetch = 0 : i64, scratch_operands = 0 : i64, tpu.core_type = #tpu.core_type<tc>, window_params = [{transform_indices = @transform_0, window_bounds = array<i64: 2, 256>}, {pipeline_mode = #tpu.pipeline_mode<synchronous>, transform_indices = @transform_1, window_bounds = array<i64: 32, 16>}, {pipeline_mode = #tpu.pipeline_mode<synchronous>, transform_indices = @transform_2, window_bounds = array<i64: 32, 32>}, {pipeline_mode = #tpu.pipeline_mode<synchronous>, transform_indices = @transform_3, window_bounds = array<i64: 32, 1>}, {pipeline_mode = #tpu.pipeline_mode<synchronous>, transform_indices = @transform_4, window_bounds = array<i64: 32, 1>}, {transform_indices = @transform_5, window_bounds = array<i64: 1, 1>}, {transform_indices = @transform_6, window_bounds = array<i64: 1, 256>}]} {
    %c0 = arith.constant 0 : index
    %c0_0 = arith.constant 0 : index
    %0 = vector.load %arg1[%c0, %c0_0] : memref<2x256xi32, #tpu.memory_space<vmem>>, vector<2x256xi32>
    %1 = vector.extract_strided_slice %0 {offsets = [0, 0], sizes = [1, 256], strides = [1, 1]} : vector<2x256xi32> to vector<1x256xi32>
    %2 = vector.extract_strided_slice %0 {offsets = [1, 0], sizes = [1, 256], strides = [1, 1]} : vector<2x256xi32> to vector<1x256xi32>
    %3 = tpu.iota {dimensions = array<i32: 0>} : vector<16x256xi32>
    %4 = vector.broadcast %1 : vector<1x256xi32> to vector<16x256xi32>
    %5 = arith.cmpi eq, %3, %4 : vector<16x256xi32>
    %6 = arith.extui %5 : vector<16x256xi1> to vector<16x256xi32>
    %7 = arith.sitofp %6 : vector<16x256xi32> to vector<16x256xf32>
    %8 = vector.broadcast %2 : vector<1x256xi32> to vector<16x256xi32>
    %9 = arith.cmpi eq, %3, %8 : vector<16x256xi32>
    %10 = arith.extui %9 : vector<16x256xi1> to vector<16x256xi32>
    %11 = arith.sitofp %10 : vector<16x256xi32> to vector<16x256xf32>
    %12 = arith.addf %7, %11 : vector<16x256xf32>
    %c0_1 = arith.constant 0 : index
    %c0_2 = arith.constant 0 : index
    %13 = vector.load %arg2[%c0_1, %c0_2] : memref<32x16xf32, #tpu.memory_space<vmem>>, vector<32x16xf32>
    %cst = arith.constant dense<0.000000e+00> : vector<32x256xf32>
    %14 = tpu.matmul %13, %12, %cst {dimension_numbers = #tpu.dot_dimension_numbers<[1], [0], [0], [1], [0, 0, 1, 1], [], []>} : vector<32x16xf32>, vector<16x256xf32>, vector<32x256xf32> -> vector<32x256xf32>
    %c0_3 = arith.constant 0 : index
    %c0_4 = arith.constant 0 : index
    %15 = vector.load %arg3[%c0_3, %c0_4] : memref<32x32xf32, #tpu.memory_space<vmem>>, vector<32x32xf32>
    %cst_5 = arith.constant dense<0.000000e+00> : vector<32x256xf32>
    %16 = tpu.matmul %15, %14, %cst_5 {dimension_numbers = #tpu.dot_dimension_numbers<[1], [0], [0], [1], [0, 0, 1, 1], [], []>} : vector<32x32xf32>, vector<32x256xf32>, vector<32x256xf32> -> vector<32x256xf32>
    %c0_6 = arith.constant 0 : index
    %c0_7 = arith.constant 0 : index
    %17 = vector.load %arg4[%c0_6, %c0_7] : memref<32x1xf32, #tpu.memory_space<vmem>>, vector<32x1xf32>
    %18 = vector.broadcast %17 : vector<32x1xf32> to vector<32x256xf32>
    %19 = arith.addf %16, %18 : vector<32x256xf32>
    %cst_8 = arith.constant 0.000000e+00 : f32
    %20 = vector.broadcast %cst_8 : f32 to vector<32x256xf32>
    %21 = arith.maximumf %19, %20 : vector<32x256xf32>
    %c0_9 = arith.constant 0 : index
    %c0_10 = arith.constant 0 : index
    %22 = vector.load %arg5[%c0_9, %c0_10] : memref<32x1xf32, #tpu.memory_space<vmem>>, vector<32x1xf32>
    %23 = vector.broadcast %22 : vector<32x1xf32> to vector<32x256xf32>
    %24 = arith.mulf %21, %23 : vector<32x256xf32>
    %cst_11 = arith.constant dense<0.000000e+00> : vector<256xf32>
    %25 = vector.multi_reduction <add>, %24, %cst_11 [0] : vector<32x256xf32> to vector<256xf32>
    %26 = vector.shape_cast %25 : vector<256xf32> to vector<1x256xf32>
    %c0_12 = arith.constant 0 : index
    %c0_13 = arith.constant 0 : index
    %27 = memref.load %arg6[%c0_12, %c0_13] : memref<1x1xf32, #tpu.memory_space<smem>>
    %28 = vector.broadcast %27 : f32 to vector<1x256xf32>
    %29 = arith.addf %26, %28 : vector<1x256xf32>
    %c0_14 = arith.constant 0 : index
    %c0_15 = arith.constant 0 : index
    %30 = vector.load %arg7[%c0_14, %c0_15] : memref<1x256xf32, #tpu.memory_space<vmem>>, vector<1x256xf32>
    tpu.vector_store %arg7[%c0_14, %c0_15], %29 {strides = array<i32>} : memref<1x256xf32, #tpu.memory_space<vmem>>, vector<1x256xf32>,
    return
  }
  func.func @transform_0(%arg0: i32) -> (i32, i32) {
    %c0_i32 = arith.constant 0 : i32
    %c0_i32_0 = arith.constant 0 : i32
    return %c0_i32, %arg0 : i32, i32
  }
  func.func @transform_1(%arg0: i32) -> (i32, i32) {
    %c0_i32 = arith.constant 0 : i32
    %c0_i32_0 = arith.constant 0 : i32
    %c0_i32_1 = arith.constant 0 : i32
    return %c0_i32, %c0_i32_0 : i32, i32
  }
  func.func @transform_2(%arg0: i32) -> (i32, i32) {
    %c0_i32 = arith.constant 0 : i32
    %c0_i32_0 = arith.constant 0 : i32
    %c0_i32_1 = arith.constant 0 : i32
    return %c0_i32, %c0_i32_0 : i32, i32
  }
  func.func @transform_3(%arg0: i32) -> (i32, i32) {
    %c0_i32 = arith.constant 0 : i32
    %c0_i32_0 = arith.constant 0 : i32
    %c0_i32_1 = arith.constant 0 : i32
    return %c0_i32, %c0_i32_0 : i32, i32
  }
  func.func @transform_4(%arg0: i32) -> (i32, i32) {
    %c0_i32 = arith.constant 0 : i32
    %c0_i32_0 = arith.constant 0 : i32
    %c0_i32_1 = arith.constant 0 : i32
    return %c0_i32, %c0_i32_0 : i32, i32
  }
  func.func @transform_5(%arg0: i32) -> (i32, i32) {
    %c0_i32 = arith.constant 0 : i32
    %c0_i32_0 = arith.constant 0 : i32
    %c0_i32_1 = arith.constant 0 : i32
    return %c0_i32, %c0_i32_0 : i32, i32
  }
  func.func @transform_6(%arg0: i32) -> (i32, i32) {
    %c0_i32 = arith.constant 0 : i32
    %c0_i32_0 = arith.constant 0 : i32
    return %c0_i32, %arg0 : i32, i32
  }
}

</mosaic_0001>

<llo_original>
// kernel: tpu_custom_call.1
$region0: #{tpu_custom_call.1}
  #allocation0 [shape = 'u32[]', space=smem, size = 0x4, offset = 0x4, fixed_abs, tag = 'smem constant byte address 0x4 - core index']
  #allocation1 [shape = 'u32[144,128]{1,0:T(1,128)}', space=vmem, size = 0x12000, scoped, tag = 'internal scratch']
  #allocation2 [shape = 'f32[1,1]{1,0:T(1,128)S(6)}', space=smem, size = 0x200, scoped, tag = 'scoped memory for tpu_custom_call.1']
  %s0 = inlined_call_operand.vmem [shape: s32[2,256], index: 0, kind: input, shape index: {}]
  %s1 = inlined_call_operand.vmem [shape: f32[32,16], index: 1, kind: input, shape index: {}]
  %s2 = inlined_call_operand.vmem [shape: f32[32,32], index: 2, kind: input, shape index: {}]
  %s3 = inlined_call_operand.vmem [shape: f32[32,1], index: 3, kind: input, shape index: {}]
  %s4 = inlined_call_operand.vmem [shape: f32[32,1], index: 4, kind: input, shape index: {}]
  %s5 = inlined_call_operand.<no memory space> [shape: f32[1,1], index: 5, kind: input, shape index: {}]
  %s6 = inlined_call_operand.hbm [shape: f32[1,256], index: 6, kind: output, shape index: {}]
  %s7 = sld [smem:[#allocation0]]
  $region34: #{tpu_custom_call.1} parent=0
    _
  %s9 = ssub.s32 1, %s7
  %s10 = scalar_select 0, %s9, %s7
  %11 = sst [smem:[#allocation2]] %s5
  $region1: #{tpu_custom_call.1} parent=0
    #allocation3 [shape = 'u8[1024]{0}', space=vmem, size = 0x400, scoped, tag = 'output window, operand 0, single buffered']
    #allocation4 [shape = 's32[1]{0}', space=sflag, size = 0x4, scoped, tag = 'scoped memory for tpu_custom_call.1']
    %12 = vsyncpa [#allocation4], 0
    // Predicated region
    $region2: #{tpu_custom_call.1} parent=1 // pred_check
      _
    $region3: #{tpu_custom_call.1} parent=1 // pred_check_branch
      %14 = sbr.rel (0) target = $region5
    $region4: #{tpu_custom_call.1} parent=1 // pred_region
      _
    $region5: #{tpu_custom_call.1} parent=1 // pred_fallthru
      _
    // Predicated region
    $region6: #{tpu_custom_call.1} parent=1 // pred_check
      _
    $region7: #{tpu_custom_call.1} parent=1 // pred_check_branch
      %16 = sbr.rel (0) target = $region9
    $region8: #{tpu_custom_call.1} parent=1 // pred_region
      _
    $region9: #{tpu_custom_call.1} parent=1 // pred_fallthru
      _
    // Predicated region
    $region10: #{tpu_custom_call.1} parent=1 // pred_check
      _
    $region11: #{tpu_custom_call.1} parent=1 // pred_check_branch
      %18 = sbr.rel (0) target = $region13
    $region12: #{tpu_custom_call.1} parent=1 // pred_region
      _
    $region13: #{tpu_custom_call.1} parent=1 // pred_fallthru
      _
    // Predicated region
    $region14: #{tpu_custom_call.1} parent=1 // pred_check
      _
    $region15: #{tpu_custom_call.1} parent=1 // pred_check_branch
      %20 = sbr.rel (0) target = $region17
    $region16: #{tpu_custom_call.1} parent=1 // pred_region
      _
    $region17: #{tpu_custom_call.1} parent=1 // pred_fallthru
      _
    // Predicated region
    $region18: #{tpu_custom_call.1} parent=1 // pred_check
      _
    $region19: #{tpu_custom_call.1} parent=1 // pred_check_branch
      %22 = sbr.rel (0) target = $region21
    $region20: #{tpu_custom_call.1} parent=1 // pred_region
      _
    $region21: #{tpu_custom_call.1} parent=1 // pred_fallthru
      _
    // Predicated region
    $region22: #{tpu_custom_call.1} parent=1 // pred_check
      _
    $region23: #{tpu_custom_call.1} parent=1 // pred_check_branch
      %24 = sbr.rel (0) target = $region25
    $region24: #{tpu_custom_call.1} parent=1 // pred_region
      _
    $region25: #{tpu_custom_call.1} parent=1 // pred_fallthru
      _
    %v25 = vld [vmem:[%s0] sm:$0xf]
    %v26 = vlaneseq
    %v27 = vshrl.u32 %v26, 7
    %v28 = vadd.s32 %v27, 8
    %v29 = vlaneseq
    %v30 = vshrl.u32 %v29, 7
    %v31 = vsub.s32 0, %v30
    %v32 = vrot.slane %v25, %v31
    %v33 = vlaneseq
    %v34 = vshrl.u32 %v33, 7
    %v35 = vsub.s32 2, %v34
    %v36 = vrot.slane %v25, %v35
    %v37 = vlaneseq
    %v38 = vshrl.u32 %v37, 7
    %v39 = vsub.s32 0, %v38
    %v40 = vrot.slane %v32, %v39
    %v41 = vlaneseq
    %v42 = vshrl.u32 %v41, 7
    %v43 = vsub.s32 0, %v42
    %v44 = vrot.slane %v36, %v43
    %vm45 = vcmp.eq.s32.totalorder %v27, %v40
    %vm46 = vcmp.eq.s32.totalorder %v27, %v44
    %vm47 = vcmp.eq.s32.totalorder %v28, %v40
    %vm48 = vcmp.eq.s32.totalorder %v28, %v44
    %v49 = vsel %vm45, 1, 0
    %v50 = vsel %vm46, 1, 0
    %v51 = vsel %vm47, 1, 0
    %v52 = vsel %vm48, 1, 0
    %v53 = vcvt.s32.f32 %v49
    %v54 = vcvt.s32.f32 %v50
    %v55 = vcvt.s32.f32 %v51
    %v56 = vcvt.s32.f32 %v52
    %v57 = vlaneseq
    %v58 = vshrl.u32 %v57, 7
    %v59 = vsub.s32 1, %v58
    %v60 = vrot.slane %v25, %v59
    %v61 = vlaneseq
    %v62 = vshrl.u32 %v61, 7
    %v63 = vsub.s32 3, %v62
    %v64 = vrot.slane %v25, %v63
    %v65 = vlaneseq
    %v66 = vshrl.u32 %v65, 7
    %v67 = vsub.s32 1, %v66
    %v68 = vrot.slane %v60, %v67
    %v69 = vlaneseq
    %v70 = vshrl.u32 %v69, 7
    %v71 = vsub.s32 1, %v70
    %v72 = vrot.slane %v64, %v71
    %vm73 = vcmp.eq.s32.totalorder %v27, %v68
    %vm74 = vcmp.eq.s32.totalorder %v27, %v72
    %vm75 = vcmp.eq.s32.totalorder %v28, %v68
    %vm76 = vcmp.eq.s32.totalorder %v28, %v72
    %v77 = vsel %vm73, 1, 0
    %v78 = vsel %vm74, 1, 0
    %v79 = vsel %vm75, 1, 0
    %v80 = vsel %vm76, 1, 0
    %v81 = vcvt.s32.f32 %v77
    %v82 = vcvt.s32.f32 %v78
    %v83 = vcvt.s32.f32 %v79
    %v84 = vcvt.s32.f32 %v80
    %v85 = vadd.f32 %v53, %v81
    %v86 = vadd.f32 %v54, %v82
    %v87 = vadd.f32 %v55, %v83
    %v88 = vadd.f32 %v56, %v84
    %v89 = vld [vmem:[%s1] sm:$0xff]
    %v90 = vld [vmem:[%s1 + $0x8] sm:$0xff]
    %v91 = vld [vmem:[%s1 + $0x10] sm:$0xff]
    %v92 = vld [vmem:[%s1 + $0x18] sm:$0xff]
    %vm93 = vcmask 130048
    %v95 = vsel %vm93, %v89, 0
    %v98 = vsel %vm93, %v90, 0
    %v101 = vsel %vm93, %v91, 0
    %v104 = vsel %vm93, %v92, 0
    %106 = vmatprep.subr.mxu0 %v86
    %107 = vmatpush1.msra.mxu0 %v85
    %108 = vmatprep.subr.mxu0 %v88
    %109 = vmatpush1.msra.mxu0 %v87
    %110 = vmatprep.subr.mxu0 0.0
    %111 = vmatpush1.msra.mxu0 0.0
    %112 = vmatprep.subr.mxu0 0.0
    %113 = vmatpush1.msra.mxu0 0.0
    %114 = vmatprep.subr.mxu0 0.0
    %115 = vmatpush1.msra.mxu0 0.0
    %116 = vmatprep.subr.mxu0 0.0
    %117 = vmatpush1.msra.mxu0 0.0
    %118 = vmatprep.subr.mxu0 0.0
    %119 = vmatpush1.msra.mxu0 0.0
    %120 = vmatprep.subr.mxu0 0.0
    %121 = vmatpush1.msra.mxu0 0.0
    %122 = vmatprep.subr.mxu0 0.0
    %123 = vmatpush1.msra.mxu0 0.0
    %124 = vmatprep.subr.mxu0 0.0
    %125 = vmatpush1.msra.mxu0 0.0
    %126 = vmatprep.subr.mxu0 0.0
    %127 = vmatpush1.msra.mxu0 0.0
    %128 = vmatprep.subr.mxu0 0.0
    %129 = vmatpush1.msra.mxu0 0.0
    %130 = vmatprep.subr.mxu0 0.0
    %131 = vmatpush1.msra.mxu0 0.0
    %132 = vmatprep.subr.mxu0 0.0
    %133 = vmatpush1.msra.mxu0 0.0
    %134 = vmatprep.subr.mxu0 0.0
    %135 = vmatpush1.msra.mxu0 0.0
    %136 = vmatprep.subr.mxu0 0.0
    %137 = vmatpush1.msra.mxu0 0.0
    %138 = vmatprep.subr.mxu0 0.0
    %139 = vmatpush1.msra.mxu0 0.0
    %140 = vmatprep.subr.mxu0 0.0
    %141 = vmatpush1.msra.mxu0 0.0
    %142 = vmatprep.subr.mxu0 0.0
    %143 = vmatpush1.msra.mxu0 0.0
    %144 = vmatprep.subr.mxu0 0.0
    %145 = vmatpush1.msra.mxu0 0.0
    %146 = vmatprep.subr.mxu0 0.0
    %147 = vmatpush1.msra.mxu0 0.0
    %148 = vmatprep.subr.mxu0 0.0
    %149 = vmatpush1.msra.mxu0 0.0
    %150 = vmatprep.subr.mxu0 0.0
    %151 = vmatpush1.msra.mxu0 0.0
    %152 = vmatprep.subr.mxu0 0.0
    %153 = vmatpush1.msra.mxu0 0.0
    %154 = vmatprep.subr.mxu0 0.0
    %155 = vmatpush1.msra.mxu0 0.0
    %156 = vmatprep.subr.mxu0 0.0
    %157 = vmatpush1.msra.mxu0 0.0
    %158 = vmatprep.subr.mxu0 0.0
    %159 = vmatpush1.msra.mxu0 0.0
    %160 = vmatprep.subr.mxu0 0.0
    %161 = vmatpush1.msra.mxu0 0.0
    %162 = vmatprep.subr.mxu0 0.0
    %163 = vmatpush1.msra.mxu0 0.0
    %164 = vmatprep.subr.mxu0 0.0
    %165 = vmatpush1.msra.mxu0 0.0
    %166 = vmatprep.subr.mxu0 0.0
    %167 = vmatpush1.msra.mxu0 0.0
    %168 = vmatprep.subr.mxu0 0.0
    %169 = vmatpush1.msra.mxu0 0.0
    %170 = vmatprep.mubr.f32.mxu0 0.0
    %171 = vmatmul.mubr.f32.gmra.mrb[0].mxu0 %v95
    %v172 = vpop.f32.mrb[0].mxu0
    %v173 = vadd.f32 0.0, %v172
    %v174 = vpop.f32.mrb[0].mxu0
    %v175 = vadd.f32 0.0, %v174
    %176 = vmatprep.mubr.f32.mxu0 0.0
    %177 = vmatmul.mubr.f32.gmra.mrb[0].mxu0 %v98
    %v178 = vpop.f32.mrb[0].mxu0
    %v179 = vadd.f32 0.0, %v178
    %v180 = vpop.f32.mrb[0].mxu0
    %v181 = vadd.f32 0.0, %v180
    %182 = vmatprep.mubr.f32.mxu0 0.0
    %183 = vmatmul.mubr.f32.gmra.mrb[0].mxu0 %v101
    %v184 = vpop.f32.mrb[0].mxu0
    %v185 = vadd.f32 0.0, %v184
    %v186 = vpop.f32.mrb[0].mxu0
    %v187 = vadd.f32 0.0, %v186
    %188 = vmatprep.mubr.f32.mxu0 0.0
    %189 = vmatmul.mubr.f32.gmra.mrb[0].mxu0 %v104
    %v190 = vpop.f32.mrb[0].mxu0
    %v191 = vadd.f32 0.0, %v190
    %v192 = vpop.f32.mrb[0].mxu0
    %v193 = vadd.f32 0.0, %v192
    %194 = vdwg.mxu0
    %v195 = vld [vmem:[%s2] sm:$0xff]
    %v196 = vld [vmem:[%s2 + $0x8] sm:$0xff]
    %v197 = vld [vmem:[%s2 + $0x10] sm:$0xff]
    %v198 = vld [vmem:[%s2 + $0x18] sm:$0xff]
    %v199 = vld [vmem:[%s3] sm:$0xff]
    %v200 = vld [vmem:[%s3 + $0x8] sm:$0xff]
    %v201 = vld [vmem:[%s3 + $0x10] sm:$0xff]
    %v202 = vld [vmem:[%s3 + $0x18] sm:$0xff]
    %204 = vset.pattern.permute.xlu0 0
    %205 = vperm.xlu0 %204, %v199
    %v206 = vpop.permute.xlu0 %205
    %209 = vset.pattern.permute.xlu0 0
    %210 = vperm.xlu0 %209, %v200
    %v211 = vpop.permute.xlu0 %210
    %214 = vset.pattern.permute.xlu0 0
    %215 = vperm.xlu0 %214, %v201
    %v216 = vpop.permute.xlu0 %215
    %219 = vset.pattern.permute.xlu0 0
    %220 = vperm.xlu0 %219, %v202
    %v221 = vpop.permute.xlu0 %220
    %vm223 = vcmask 261120
    %v225 = vsel %vm223, %v195, 0
    %v228 = vsel %vm223, %v196, 0
    %v231 = vsel %vm223, %v197, 0
    %v234 = vsel %vm223, %v198, 0
    %236 = vmatprep.subr.mxu0 %v175
    %237 = vmatpush1.msra.mxu0 %v173
    %238 = vmatprep.subr.mxu0 %v181
    %239 = vmatpush1.msra.mxu0 %v179
    %240 = vmatprep.subr.mxu0 %v187
    %241 = vmatpush1.msra.mxu0 %v185
    %242 = vmatprep.subr.mxu0 %v193
    %243 = vmatpush1.msra.mxu0 %v191
    %244 = vmatprep.subr.mxu0 0.0
    %245 = vmatpush1.msra.mxu0 0.0
    %246 = vmatprep.subr.mxu0 0.0
    %247 = vmatpush1.msra.mxu0 0.0
    %248 = vmatprep.subr.mxu0 0.0
    %249 = vmatpush1.msra.mxu0 0.0
    %250 = vmatprep.subr.mxu0 0.0
    %251 = vmatpush1.msra.mxu0 0.0
    %252 = vmatprep.subr.mxu0 0.0
    %253 = vmatpush1.msra.mxu0 0.0
    %254 = vmatprep.subr.mxu0 0.0
    %255 = vmatpush1.msra.mxu0 0.0
    %256 = vmatprep.subr.mxu0 0.0
    %257 = vmatpush1.msra.mxu0 0.0
    %258 = vmatprep.subr.mxu0 0.0
    %259 = vmatpush1.msra.mxu0 0.0
    %260 = vmatprep.subr.mxu0 0.0
    %261 = vmatpush1.msra.mxu0 0.0
    %262 = vmatprep.subr.mxu0 0.0
    %263 = vmatpush1.msra.mxu0 0.0
    %264 = vmatprep.subr.mxu0 0.0
    %265 = vmatpush1.msra.mxu0 0.0
    %266 = vmatprep.subr.mxu0 0.0
    %267 = vmatpush1.msra.mxu0 0.0
    %268 = vmatprep.subr.mxu0 0.0
    %269 = vmatpush1.msra.mxu0 0.0
    %270 = vmatprep.subr.mxu0 0.0
    %271 = vmatpush1.msra.mxu0 0.0
    %272 = vmatprep.subr.mxu0 0.0
    %273 = vmatpush1.msra.mxu0 0.0
    %274 = vmatprep.subr.mxu0 0.0
    %275 = vmatpush1.msra.mxu0 0.0
    %276 = vmatprep.subr.mxu0 0.0
    %277 = vmatpush1.msra.mxu0 0.0
    %278 = vmatprep.subr.mxu0 0.0
    %279 = vmatpush1.msra.mxu0 0.0
    %280 = vmatprep.subr.mxu0 0.0
    %281 = vmatpush1.msra.mxu0 0.0
    %282 = vmatprep.subr.mxu0 0.0
    %283 = vmatpush1.msra.mxu0 0.0
    %284 = vmatprep.subr.mxu0 0.0
    %285 = vmatpush1.msra.mxu0 0.0
    %286 = vmatprep.subr.mxu0 0.0
    %287 = vmatpush1.msra.mxu0 0.0
    %288 = vmatprep.subr.mxu0 0.0
    %289 = vmatpush1.msra.mxu0 0.0
    %290 = vmatprep.subr.mxu0 0.0
    %291 = vmatpush1.msra.mxu0 0.0
    %292 = vmatprep.subr.mxu0 0.0
    %293 = vmatpush1.msra.mxu0 0.0
    %294 = vmatprep.subr.mxu0 0.0
    %295 = vmatpush1.msra.mxu0 0.0
    %296 = vmatprep.subr.mxu0 0.0
    %297 = vmatpush1.msra.mxu0 0.0
    %298 = vmatprep.subr.mxu0 0.0
    %299 = vmatpush1.msra.mxu0 0.0
    %300 = vmatprep.mubr.f32.mxu0 0.0
    %301 = vmatmul.mubr.f32.gmra.mrb[0].mxu0 %v225
    %v302 = vpop.f32.mrb[0].mxu0
    %v303 = vadd.f32 %v206, %v302
    %v304 = vpop.f32.mrb[0].mxu0
    %v305 = vadd.f32 %v206, %v304
    %306 = vmatprep.mubr.f32.mxu0 0.0
    %307 = vmatmul.mubr.f32.gmra.mrb[0].mxu0 %v228
    %v308 = vpop.f32.mrb[0].mxu0
    %v309 = vadd.f32 %v211, %v308
    %v310 = vpop.f32.mrb[0].mxu0
    %v311 = vadd.f32 %v211, %v310
    %312 = vmatprep.mubr.f32.mxu0 0.0
    %313 = vmatmul.mubr.f32.gmra.mrb[0].mxu0 %v231
    %v314 = vpop.f32.mrb[0].mxu0
    %v315 = vadd.f32 %v216, %v314
    %v316 = vpop.f32.mrb[0].mxu0
    %v317 = vadd.f32 %v216, %v316
    %318 = vmatprep.mubr.f32.mxu0 0.0
    %319 = vmatmul.mubr.f32.gmra.mrb[0].mxu0 %v234
    %v320 = vpop.f32.mrb[0].mxu0
    %v321 = vadd.f32 %v221, %v320
    %v322 = vpop.f32.mrb[0].mxu0
    %v323 = vadd.f32 %v221, %v322
    %324 = vdwg.mxu0
    %v325 = vmax.f32 %v303, 0.0
    %v326 = vmax.f32 %v305, 0.0
    %v327 = vmax.f32 %v309, 0.0
    %v328 = vmax.f32 %v311, 0.0
    %v329 = vmax.f32 %v315, 0.0
    %v330 = vmax.f32 %v317, 0.0
    %v331 = vmax.f32 %v321, 0.0
    %v332 = vmax.f32 %v323, 0.0
    %v333 = vld [vmem:[%s4] sm:$0xff]
    %v334 = vld [vmem:[%s4 + $0x8] sm:$0xff]
    %v335 = vld [vmem:[%s4 + $0x10] sm:$0xff]
    %v336 = vld [vmem:[%s4 + $0x18] sm:$0xff]
    %338 = vset.pattern.permute.xlu0 0
    %339 = vperm.xlu0 %338, %v333
    %v340 = vpop.permute.xlu0 %339
    %343 = vset.pattern.permute.xlu0 0
    %344 = vperm.xlu0 %343, %v334
    %v345 = vpop.permute.xlu0 %344
    %348 = vset.pattern.permute.xlu0 0
    %349 = vperm.xlu0 %348, %v335
    %v350 = vpop.permute.xlu0 %349
    %353 = vset.pattern.permute.xlu0 0
    %354 = vperm.xlu0 %353, %v336
    %v355 = vpop.permute.xlu0 %354
    %v357 = vmul.f32 %v325, %v340
    %v358 = vmul.f32 %v326, %v340
    %v359 = vmul.f32 %v327, %v345
    %v360 = vmul.f32 %v328, %v345
    %v361 = vmul.f32 %v329, %v350
    %v362 = vmul.f32 %v330, %v350
    %v363 = vmul.f32 %v331, %v355
    %v364 = vmul.f32 %v332, %v355
    %v365 = vadd.f32 %v357, %v359
    %v366 = vadd.f32 %v365, %v361
    %v367 = vadd.f32 %v366, %v363
    %v368 = vrot.slane %v367, 4
    %v369 = vadd.f32 %v367, %v368
    %v370 = vrot.slane %v369, 2
    %v371 = vadd.f32 %v369, %v370
    %v372 = vrot.slane %v371, 1
    %v373 = vadd.f32 %v371, %v372
    %v374 = vadd.f32 %v358, %v360
    %v375 = vadd.f32 %v374, %v362
    %v376 = vadd.f32 %v375, %v364
    %v377 = vrot.slane %v376, 4
    %v378 = vadd.f32 %v376, %v377
    %v379 = vrot.slane %v378, 2
    %v380 = vadd.f32 %v378, %v379
    %v381 = vrot.slane %v380, 1
    %v382 = vadd.f32 %v380, %v381
    %s383 = sld [smem:[#allocation2]]
    %v384 = vstv %s383
    %v385 = vadd.f32 %v373, %v384
    %v386 = vadd.f32 %v382, %v384
    %v389 = vcombine.low %v385, %v386
    %v391 = vunpack.c.l.s4 1966171168
    %v392 = vunpack.c.0.s8 %v391
    %v393 = vlaneseq
    %v394 = vshrl.u32 %v393, 7
    %v395 = vsub.s32 %v392, %v394
    %v396 = vrot.slane %v389, %v395
    %v398 = vunpack.c.l.s4 1966171168
    %v399 = vunpack.c.0.s8 %v398
    %v400 = vlaneseq
    %v401 = vshrl.u32 %v400, 7
    %v402 = vsub.s32 %v399, %v401
    %v403 = vrot.slane %v396, %v402
    %v405 = vlaneseq
    %vm406 = vcmp.ge.s32.totalorder %v405, 0
    %vm407 = vcmp.lt.s32.totalorder %v405, 256
    %vm408 = vmand %vm406, %vm407
    %409 = vst.msk [vmem:[#allocation3] sm:$0x3] %vm408, %v403
    // Predicated region
    $region26: #{tpu_custom_call.1} parent=1 // pred_check
      _
    $region27: #{tpu_custom_call.1} parent=1 // pred_check_branch
      %411 = sbr.rel (0) target = $region29
    $region28: #{tpu_custom_call.1} parent=1 // pred_region
      %s413 = ssub.s32 32, 32
      %414 = vsyncadd [#allocation4], %s413
      %s416 = sshll.u32 [#allocation3], 4
      %s417 = int_to_ptr.vmem [resolvable:$true] %s416
      %419 = dma.vmem_to_hbm [thread:$0]  %s417, 32, %s6, [#allocation4]
    $region29: #{tpu_custom_call.1} parent=1 // pred_fallthru
      _
    // Predicated region
    $region30: #{tpu_custom_call.1} parent=1 // pred_check
      _
    $region31: #{tpu_custom_call.1} parent=1 // pred_check_branch
      %421 = sbr.rel (0) target = $region33
    $region32: #{tpu_custom_call.1} parent=1 // pred_region
      %422 = dma.done [#allocation4], 32
    $region33: #{tpu_custom_call.1} parent=1 // pred_fallthru
      _
    %423 = vsyncpa [#allocation4], 1

</llo_original>
